<compile_context>
chip_gen: v7x
topology: tpu7x:2x2x1
jax: 0.10.0
libtpu: 0.0.40
codegen_flags: <defaults>
</compile_context>

<pallas_src>
import functools

import jax
import jax.numpy as jnp
from jax.experimental import pallas as pl
from jax.experimental.pallas import tpu as pltpu

_MiB = 1024 * 1024


def _label_smoothing_kernel(pred_ref, tgt_logit_ref, out_ref, *, n_classes, smoothing):
    """One grid step: (TB, C) logits + (TB, 1) pre-gathered target logits -> (TB, 1) losses."""
    x = pred_ref[...].astype(jnp.float32)                         # (TB, C) f32
    # Numerically-stable log_softmax pieces, all per-row (lane-axis reductions).
    m = jnp.max(x, axis=-1, keepdims=True)                        # (TB, 1)
    sum_x = jnp.sum(x, axis=-1, keepdims=True)                    # (TB, 1)
    e = jnp.exp(x - m)                                            # (TB, C), EUP
    lse = jnp.log(jnp.sum(e, axis=-1, keepdims=True))             # (TB, 1)

    c = jnp.float32(n_classes)
    # sum_c logp = sum_c x - C*(m + lse)
    sum_logp = sum_x - c * (m + lse)
    # logp at the target class from the pre-gathered logit (no iota / select / 3rd reduce).
    logp_tgt = (tgt_logit_ref[...] - m) - lse                     # (TB, 1)

    confidence = jnp.float32(1.0 - smoothing)
    off = jnp.float32(smoothing / (n_classes - 1))
    # loss_row = sum_c(-true_dist * logp) = -(off * sum_logp + (confidence - off) * logp_tgt)
    out_ref[...] = -(off * sum_logp + (confidence - off) * logp_tgt)


def _vmem_capacity_bytes():
    """Physical VMEM for this generation; conservative (v7x) fallback if unavailable."""
    try:
        info = pltpu.get_tpu_info()
        cap = getattr(info, "vmem_capacity_bytes", None)
        if cap:
            return int(cap)
    except Exception:
        pass
    return 64 * _MiB


def _pick_tile_b(batch, n_classes, itemsize, vmem_limit_bytes):
    """Largest useful sublane-aligned batch tile that fits the VMEM budget.

    Budget counts the 2 pipelined pred buffers (input dtype) PLUS ~3 block-sized f32
    temporaries created inside the kernel (f32 cast, x-m, exp) and the narrow (row,1)
    buffers, so v7x's 64 MiB VMEM is never approached.  The batch is split 2 ways
    (when big enough) so the grid has >= 2 steps: v7x megacore sharding and DMA/compute
    overlap on every generation.  No tiny-tile heuristic: below ~128-row blocks,
    streaming kernels fall far off the HBM roofline.
    """
    sublane = 16 if itemsize == 2 else 8          # bf16 packs 16 rows / vreg, f32 packs 8
    rup = lambda x: -(-x // sublane) * sublane
    bytes_per_row = n_classes * (2 * itemsize + 3 * 4) + 64
    budget = int(vmem_limit_bytes * 0.8)          # headroom for out/tgt buffers + scratch
    cap = max(sublane, (budget // bytes_per_row) // sublane * sublane)

    half = rup(-(-batch // 2))                    # 2-way split target
    if half >= batch:
        # Batch too small to split into two aligned tiles: one full-batch block
        # (block dims == array dims are always legal) unless VMEM forces tiling.
        return max(1, min(batch, cap))
    return min(half, cap)


def label_smoothing_loss(pred, target, *, classes, smoothing=0.0, tile_b=None):
    """pred: (B, C) float32/bfloat16 logits; target: (B,) int labels. Returns scalar f32."""
    B, C = pred.shape
    assert C == classes
    itemsize = jnp.dtype(pred.dtype).itemsize

    # Generation-aware VMEM limit: ~100 MiB on v5e/v6e (128 MiB physical), ~56 MiB on
    # v7x (64 MiB physical), leaving room for compiler-internal scratch.
    vmem_cap = _vmem_capacity_bytes()
    vmem_limit = int(max(32 * _MiB, min(vmem_cap - 8 * _MiB, 100 * _MiB)))

    if tile_b is None:
        tile_b = _pick_tile_b(B, C, itemsize, vmem_limit)
    grid = pl.cdiv(B, tile_b)                     # partial last tile: stores are masked

    # Pre-gather the target logit in XLA (removes the (TB, C) iota/compare/select and a
    # full reduce chain from the kernel -> stays HBM-bound on v7x / bf16-v6e).
    tgt_logit = jnp.take_along_axis(
        pred, target.astype(jnp.int32)[:, None], axis=-1).astype(jnp.float32)   # (B, 1)

    kernel = functools.partial(
        _label_smoothing_kernel, n_classes=C, smoothing=float(smoothing))

    cost = pl.CostEstimate(
        flops=6 * B * C,                          # sub/reduce chains + per-row epilogue
        transcendentals=B * C,                    # exp (log is per-row, negligible)
        bytes_accessed=B * C * itemsize + 8 * B)  # pred in + tgt_logit in + row losses out

    row_loss = pl.pallas_call(
        kernel,
        out_shape=jax.ShapeDtypeStruct((B, 1), jnp.float32),
        grid_spec=pltpu.PrefetchScalarGridSpec(
            num_scalar_prefetch=0,
            grid=(grid,),
            in_specs=[
                pl.BlockSpec((tile_b, C), lambda i: (i, 0)),
                pl.BlockSpec((tile_b, 1), lambda i: (i, 0)),
            ],
            out_specs=pl.BlockSpec((tile_b, 1), lambda i: (i, 0)),
        ),
        compiler_params=pltpu.CompilerParams(
            dimension_semantics=("parallel",),    # no cross-step carry -> megacore OK
            vmem_limit_bytes=vmem_limit),
        cost_estimate=cost,
    )(pred, tgt_logit)

    # Tiny final mean over the batch in XLA: keeps the grid fully parallel and is
    # numerically safer than a running scalar accumulator.
    return jnp.mean(row_loss)


def _reference(pred, target, classes, smoothing):
    logp = jax.nn.log_softmax(pred.astype(jnp.float32), axis=-1)
    confidence = 1.0 - smoothing
    off = smoothing / (classes - 1)
    true_dist = jnp.where(
        jax.nn.one_hot(target, classes, dtype=jnp.bool_), confidence, off)
    return jnp.mean(jnp.sum(-true_dist * logp, axis=-1))


if __name__ == "__main__":
    key = jax.random.PRNGKey(0)
    k1, k2, k3, k4 = jax.random.split(key, 4)

    # Test 1: f32 logits, lane-dense C (multiple of 128), 2-step grid.
    B1, C1, S1 = 64, 384, 0.1
    pred1 = jax.random.normal(k1, (B1, C1), dtype=jnp.float32)
    tgt1 = jax.random.randint(k2, (B1,), 0, C1, dtype=jnp.int32)
    loss1 = jax.block_until_ready(
        label_smoothing_loss(pred1, tgt1, classes=C1, smoothing=S1))
    ref1 = _reference(pred1, tgt1, C1, S1)
    assert jnp.allclose(loss1, ref1, rtol=1e-5, atol=1e-5), (loss1, ref1)

    # Test 2: bf16 logits, C not a multiple of 128 (padded lanes), partial last batch tile.
    B2, C2, S2 = 24, 100, 0.05
    pred2 = jax.random.normal(k3, (B2, C2), dtype=jnp.float32).astype(jnp.bfloat16)
    tgt2 = jax.random.randint(k4, (B2,), 0, C2, dtype=jnp.int32)
    loss2 = jax.block_until_ready(
        label_smoothing_loss(pred2, tgt2, classes=C2, smoothing=S2))
    ref2 = _reference(pred2, tgt2, C2, S2)
    assert jnp.allclose(loss2, ref2, rtol=1e-4, atol=1e-4), (loss2, ref2)

    print("KERNEL_OK")
</pallas_src>

<mosaic_0001>
module attributes {stable_mosaic.version = 11 : i64} {
  func.func @_label_smoothing_kernel(%arg0: i32, %arg1: memref<32x384xf32, #tpu.memory_space<vmem>>, %arg2: memref<32x1xf32, #tpu.memory_space<vmem>>, %arg3: memref<32x1xf32, #tpu.memory_space<vmem>>) attributes {dimension_semantics = [#tpu.dimension_semantics<parallel>], iteration_bounds = array<i64: 2>, scalar_prefetch = 0 : i64, scratch_operands = 0 : i64, tpu.core_type = #tpu.core_type<tc>, window_params = [{transform_indices = @transform_0, window_bounds = array<i64: 32, 384>}, {transform_indices = @transform_1, window_bounds = array<i64: 32, 1>}, {transform_indices = @transform_2, window_bounds = array<i64: 32, 1>}]} {
    %c0 = arith.constant 0 : index
    %c0_0 = arith.constant 0 : index
    %0 = vector.load %arg1[%c0, %c0_0] : memref<32x384xf32, #tpu.memory_space<vmem>>, vector<32x384xf32>
    %cst = arith.constant dense<0xFF800000> : vector<32xf32>
    %1 = vector.multi_reduction <maximumf>, %0, %cst [1] : vector<32x384xf32> to vector<32xf32>
    %2 = vector.shape_cast %1 : vector<32xf32> to vector<32x1xf32>
    %cst_1 = arith.constant dense<0.000000e+00> : vector<32xf32>
    %3 = vector.multi_reduction <add>, %0, %cst_1 [1] : vector<32x384xf32> to vector<32xf32>
    %4 = vector.shape_cast %3 : vector<32xf32> to vector<32x1xf32>
    %5 = vector.broadcast %2 : vector<32x1xf32> to vector<32x384xf32>
    %6 = arith.subf %0, %5 : vector<32x384xf32>
    %7 = math.exp %6 : vector<32x384xf32>
    %cst_2 = arith.constant dense<0.000000e+00> : vector<32xf32>
    %8 = vector.multi_reduction <add>, %7, %cst_2 [1] : vector<32x384xf32> to vector<32xf32>
    %9 = vector.shape_cast %8 : vector<32xf32> to vector<32x1xf32>
    %10 = math.log %9 : vector<32x1xf32>
    %11 = arith.addf %2, %10 : vector<32x1xf32>
    %cst_3 = arith.constant 3.840000e+02 : f32
    %12 = vector.broadcast %cst_3 : f32 to vector<32x1xf32>
    %13 = arith.mulf %12, %11 : vector<32x1xf32>
    %14 = arith.subf %4, %13 : vector<32x1xf32>
    %c0_4 = arith.constant 0 : index
    %c0_5 = arith.constant 0 : index
    %15 = vector.load %arg2[%c0_4, %c0_5] : memref<32x1xf32, #tpu.memory_space<vmem>>, vector<32x1xf32>
    %16 = arith.subf %15, %2 : vector<32x1xf32>
    %17 = arith.subf %16, %10 : vector<32x1xf32>
    %cst_6 = arith.constant 2.61096604E-4 : f32
    %18 = vector.broadcast %cst_6 : f32 to vector<32x1xf32>
    %19 = arith.mulf %18, %14 : vector<32x1xf32>
    %cst_7 = arith.constant 0.899999976 : f32
    %cst_8 = arith.constant 2.61096604E-4 : f32
    %20 = arith.subf %cst_7, %cst_8 : f32
    %21 = vector.broadcast %20 : f32 to vector<32x1xf32>
    %22 = arith.mulf %21, %17 : vector<32x1xf32>
    %23 = arith.addf %19, %22 : vector<32x1xf32>
    %cst_9 = arith.constant 0.000000e+00 : f32
    %24 = vector.broadcast %cst_9 : f32 to vector<32x1xf32>
    %25 = arith.subf %24, %23 : vector<32x1xf32>
    %c0_10 = arith.constant 0 : index
    %c0_11 = arith.constant 0 : index
    %26 = vector.load %arg3[%c0_10, %c0_11] : memref<32x1xf32, #tpu.memory_space<vmem>>, vector<32x1xf32>
    tpu.vector_store %arg3[%c0_10, %c0_11], %25 {strides = array<i32>} : memref<32x1xf32, #tpu.memory_space<vmem>>, vector<32x1xf32>,
    return
  }
  func.func @transform_0(%arg0: i32) -> (i32, i32) {
    %c0_i32 = arith.constant 0 : i32
    %c0_i32_0 = arith.constant 0 : i32
    return %arg0, %c0_i32 : i32, i32
  }
  func.func @transform_1(%arg0: i32) -> (i32, i32) {
    %c0_i32 = arith.constant 0 : i32
    %c0_i32_0 = arith.constant 0 : i32
    return %arg0, %c0_i32 : i32, i32
  }
  func.func @transform_2(%arg0: i32) -> (i32, i32) {
    %c0_i32 = arith.constant 0 : i32
    %c0_i32_0 = arith.constant 0 : i32
    return %arg0, %c0_i32 : i32, i32
  }
}

</mosaic_0001>

<llo_original>
// kernel: tpu_custom_call.1
$region0: #{tpu_custom_call.1}
  #allocation0 [shape = 'u32[]', space=smem, size = 0x4, offset = 0x4, fixed_abs, tag = 'smem constant byte address 0x4 - core index']
  #allocation1 [shape = 'u32[144,128]{1,0:T(1,128)}', space=vmem, size = 0x12000, scoped, tag = 'internal scratch']
  %s0 = inlined_call_operand.hbm [shape: f32[64,384], index: 0, kind: input, shape index: {}]
  %s1 = inlined_call_operand.vmem [shape: f32[64,1], index: 1, kind: input, shape index: {}]
  %s2 = inlined_call_operand.vmem [shape: f32[64,1], index: 2, kind: output, shape index: {}]
  %s3 = sld [smem:[#allocation0]]
  $region45: #{tpu_custom_call.1} parent=0
    _
  %s5 = ssub.s32 1, %s3
  %s6 = scalar_select 0, %s5, %s3
  $region1: #{tpu_custom_call.1} parent=0
    #allocation2 [shape = 'u8[98304]{0}', space=vmem, size = 0x18000, scoped, tag = 'input window, operand 0']
    #allocation3 [shape = 's32[2]{0}', space=sflag, size = 0x8, scoped, tag = 'scoped memory for tpu_custom_call.1']
    %7 = vsyncpa [#allocation3], 0
    %s8 = scalar_lea.sflag [#allocation3], 1
    %9 = vsyncpa %s8, 0
    loop: start=0, step=1, limit=4
    $region2: #{tpu_custom_call.1} parent=1 // loop_pre_header
      _
    $region3: #{tpu_custom_call.1} parent=1 // loop_header
      %s11 = sphi 0, %s15
      %p12 = scmp.ge.s32.totalorder %s11, 4
      %s21 = sphi 0, %s23
      %s24 = sphi 0, %s21
      %s25 = sphi 0, %s24
      %s41 = sphi 0, %s25
      %s47 = sphi 0, %s49
      %s50 = sphi 0, %s47
      %s51 = sphi 0, %s50
      %s67 = sphi 0, %s51
      %s73 = sphi 0, %s75
      %s76 = sphi 0, %s73
      %s77 = sphi 0, %s76
      %s93 = sphi 0, %s77
    $region4: #{tpu_custom_call.1} parent=1 // loop_header_branch
      %14 = sbr.rel (%p12) target = $region8
    $region5: #{tpu_custom_call.1} parent=1 // loop_body
      %s16 = ssub.s32 %s11, 1
      %s17 = ssub.s32 %s11, 2
      %s18 = sadd.s32 %s11, 1
      %s19 = ssub.s32 %s11, %s18
      %p20 = scmp.eq.s32.totalorder %s19, 0
      %s22 = sadd.s32 %s21, 1
      %s23 = scalar_select %p20, %s21, %s22
      %p26 = pneg %p20
      %p27 = scmp.eq.s32.totalorder %s11, 1
      %p28 = por %p26, %p27
      %p29 = scmp.ne.s32.totalorder %s21, %s24
      %p30 = scmp.eq.s32.totalorder %s11, 0
      %p31 = por %p29, %p30
      %p32 = scmp.ne.s32.totalorder %s21, %s24
      %p33 = scmp.eq.s32.totalorder %s16, 1
      %p34 = por %p32, %p33
      %p35 = scmp.ne.s32.totalorder %s24, %s25
      %p36 = scmp.eq.s32.totalorder %s16, 0
      %p37 = por %p35, %p36
      %p38 = scmp.ne.s32.totalorder %s24, %s25
      %p39 = scmp.eq.s32.totalorder %s17, 1
      %p40 = por %p38, %p39
      %p42 = scmp.ne.s32.totalorder %s25, %s41
      %p43 = scmp.eq.s32.totalorder %s17, 0
      %p44 = por %p42, %p43
      %s45 = ssub.s32 %s11, %s18
      %p46 = scmp.eq.s32.totalorder %s45, 0
      %s48 = sadd.s32 %s47, 1
      %s49 = scalar_select %p46, %s47, %s48
      %p52 = pneg %p46
      %p53 = scmp.eq.s32.totalorder %s11, 1
      %p54 = por %p52, %p53
      %p55 = scmp.ne.s32.totalorder %s47, %s50
      %p56 = scmp.eq.s32.totalorder %s11, 0
      %p57 = por %p55, %p56
      %p58 = scmp.ne.s32.totalorder %s47, %s50
      %p59 = scmp.eq.s32.totalorder %s16, 1
      %p60 = por %p58, %p59
      %p61 = scmp.ne.s32.totalorder %s50, %s51
      %p62 = scmp.eq.s32.totalorder %s16, 0
      %p63 = por %p61, %p62
      %p64 = scmp.ne.s32.totalorder %s50, %s51
      %p65 = scmp.eq.s32.totalorder %s17, 1
      %p66 = por %p64, %p65
      %p68 = scmp.ne.s32.totalorder %s51, %s67
      %p69 = scmp.eq.s32.totalorder %s17, 0
      %p70 = por %p68, %p69
      %s71 = ssub.s32 %s11, %s18
      %p72 = scmp.eq.s32.totalorder %s71, 0
      %s74 = sadd.s32 %s73, 1
      %s75 = scalar_select %p72, %s73, %s74
      %p78 = pneg %p72
      %p79 = scmp.eq.s32.totalorder %s11, 1
      %p80 = por %p78, %p79
      %p81 = scmp.ne.s32.totalorder %s73, %s76
      %p82 = scmp.eq.s32.totalorder %s11, 0
      %p83 = por %p81, %p82
      %p84 = scmp.ne.s32.totalorder %s73, %s76
      %p85 = scmp.eq.s32.totalorder %s16, 1
      %p86 = por %p84, %p85
      %p87 = scmp.ne.s32.totalorder %s76, %s77
      %p88 = scmp.eq.s32.totalorder %s16, 0
      %p89 = por %p87, %p88
      %p90 = scmp.ne.s32.totalorder %s76, %s77
      %p91 = scmp.eq.s32.totalorder %s17, 1
      %p92 = por %p90, %p91
      %p94 = scmp.ne.s32.totalorder %s77, %s93
      %p95 = scmp.eq.s32.totalorder %s17, 0
      %p96 = por %p94, %p95
      %p97 = scmp.le.s32.totalorder 1, %s11
      %p98 = scmp.lt.s32.totalorder %s11, 3
      %p99 = pnand %p97, %p98
      %p100 = pneg %p99
      // Predicated region
      $region9: #{tpu_custom_call.1} parent=5 // pred_check
        _
      $region10: #{tpu_custom_call.1} parent=5 // pred_check_branch
        %102 = sbr.rel (%p99) target = $region12
      $region11: #{tpu_custom_call.1} parent=5 // pred_region
        %s103 = ssub.s32 %s11, 1
      $region12: #{tpu_custom_call.1} parent=5 // pred_fallthru
        _
      %p104 = scmp.lt.s32.totalorder %s11, 2
      // Predicated region
      $region13: #{tpu_custom_call.1} parent=5 // pred_check
        %p105 = pneg %p104
      $region14: #{tpu_custom_call.1} parent=5 // pred_check_branch
        %107 = sbr.rel (%p105) target = $region16
      $region15: #{tpu_custom_call.1} parent=5 // pred_region
        // Predicated region
        $region17: #{tpu_custom_call.1} parent=15 // pred_check
          %p108 = pneg %p31
        $region18: #{tpu_custom_call.1} parent=15 // pred_check_branch
          %110 = sbr.rel (%p108) target = $region20
        $region19: #{tpu_custom_call.1} parent=15 // pred_region
          %s111 = sand.u32 %s21, 1
          %s112 = scalar_lea.sflag [#allocation3], %s111
          %s113 = sand.u32 %s21, 1
          %s114 = smul.addr %s113, 96
          %s115 = scalar_lea.vmem [#allocation2], %s114
          %s116 = smul.u32 4, %s11
          %s118 = ssub.s32 1536, 1536
          %119 = vsyncadd %s112, %s118
          %s120 = smul.addr %s116, 3
          %s121 = smul.addr %s120, 128
          %s122 = scalar_lea.hbm %s0, %s121
          %s123 = sshll.u32 %s115, 4
          %s124 = int_to_ptr.vmem [resolvable:$true] %s123
          %129 = dma.hbm_to_vmem [thread:$0]  %s122, 1536, %s124, %s112, 384, 384, 24
        $region20: #{tpu_custom_call.1} parent=15 // pred_fallthru
          _
        // Predicated region
        $region21: #{tpu_custom_call.1} parent=15 // pred_check
          %p130 = pneg %p57
        $region22: #{tpu_custom_call.1} parent=15 // pred_check_branch
          %132 = sbr.rel (%p130) target = $region24
        $region23: #{tpu_custom_call.1} parent=15 // pred_region
          %s133 = smul.u32 4, %s11
          %p134 = scmp.lt.s32.totalorder %s133, 7
          %s135 = scalar_select %p134, %s133, 7
          %s136 = smul.addr %s135, 8
          %s137 = scalar_lea.vmem %s1, %s136
          %s138 = smul.u32 4, %s11
        $region24: #{tpu_custom_call.1} parent=15 // pred_fallthru
          _
      $region16: #{tpu_custom_call.1} parent=5 // pred_fallthru
        _
      %p139 = scmp.le.s32.totalorder 1, %s11
      %p140 = scmp.lt.s32.totalorder %s11, 3
      %p141 = pnand %p139, %p140
      %p142 = pneg %p141
      // Predicated region
      $region25: #{tpu_custom_call.1} parent=5 // pred_check
        _
      $region26: #{tpu_custom_call.1} parent=5 // pred_check_branch
        %144 = sbr.rel (%p141) target = $region28
      $region27: #{tpu_custom_call.1} parent=5 // pred_region
        %s145 = ssub.s32 %s11, 1
        %s146 = sand.u32 %s24, 1
        %s147 = scalar_lea.sflag [#allocation3], %s146
        %s148 = sand.u32 %s24, 1
        %s149 = smul.addr %s148, 96
        %s150 = scalar_lea.vmem [#allocation2], %s149
        // Predicated region
        $region29: #{tpu_custom_call.1} parent=27 // pred_check
          %p151 = pneg %p37
        $region30: #{tpu_custom_call.1} parent=27 // pred_check_branch
          %153 = sbr.rel (%p151) target = $region32
        $region31: #{tpu_custom_call.1} parent=27 // pred_region
          %154 = dma.done %s147, 1536
        $region32: #{tpu_custom_call.1} parent=27 // pred_fallthru
          _
        %s155 = sand.u32 %s24, 1
        %s156 = scalar_lea.sflag [#allocation3], %s155
        %s157 = sand.u32 %s24, 1
        %s158 = smul.addr %s157, 96
        %s159 = scalar_lea.vmem [#allocation2], %s158
        %p160 = pneg %p37
        %p161 = pneg %p34
        %s162 = smul.u32 4, %s16
        %p163 = scmp.lt.s32.totalorder %s162, 7
        %s164 = scalar_select %p163, %s162, 7
        %s165 = smul.addr %s164, 8
        %s166 = scalar_lea.vmem %s1, %s165
        %p167 = pneg %p63
        %p168 = pneg %p60
        %p169 = pneg %p89
        %p170 = pneg %p86
        %s171 = smul.u32 4, %s16
        %p172 = scmp.lt.s32.totalorder %s171, 7
        %s173 = scalar_select %p172, %s171, 7
        %s174 = smul.addr %s173, 8
        %s175 = scalar_lea.vmem %s2, %s174
        %s176 = smul.u32 4, %s16
        %s177 = smul.u32 4, %s16
        %p178 = scmp.lt.s32.totalorder %s177, 7
        %s179 = scalar_select %p178, %s177, 7
        %s180 = smul.addr %s179, 8
        %s181 = scalar_lea.vmem %s1, %s180
        %s182 = smul.u32 4, %s16
        %s183 = smul.u32 4, %s16
        %p184 = scmp.lt.s32.totalorder %s183, 7
        %s185 = scalar_select %p184, %s183, 7
        %s186 = smul.addr %s185, 8
        %s187 = scalar_lea.vmem %s2, %s186
        %s188 = smul.u32 4, %s16
        %v189 = vld [vmem:[%s150] sm:$0xff]
        %v190 = vld [vmem:[%s150 + $0x8] sm:$0xff]
        %v191 = vld [vmem:[%s150 + $0x10] sm:$0xff]
        %v192 = vld [vmem:[%s150 + $0x18] sm:$0xff]
        %v193 = vld [vmem:[%s150 + $0x20] sm:$0xff]
        %v194 = vld [vmem:[%s150 + $0x28] sm:$0xff]
        %v195 = vld [vmem:[%s150 + $0x30] sm:$0xff]
        %v196 = vld [vmem:[%s150 + $0x38] sm:$0xff]
        %v197 = vld [vmem:[%s150 + $0x40] sm:$0xff]
        %v198 = vld [vmem:[%s150 + $0x48] sm:$0xff]
        %v199 = vld [vmem:[%s150 + $0x50] sm:$0xff]
        %v200 = vld [vmem:[%s150 + $0x58] sm:$0xff]
        %v201 = vmax.f32 %v189, %v190
        %v202 = vmax.f32 %v201, %v191
        %203 = vmax.xlane.f32.xlu0 %v202
        %v204 = vpop.xlane.xlu0 %203
        %v205 = vmax.f32 %v192, %v193
        %v206 = vmax.f32 %v205, %v194
        %207 = vmax.xlane.f32.xlu0 %v206
        %v208 = vpop.xlane.xlu0 %207
        %v209 = vmax.f32 %v195, %v196
        %v210 = vmax.f32 %v209, %v197
        %211 = vmax.xlane.f32.xlu0 %v210
        %v212 = vpop.xlane.xlu0 %211
        %v213 = vmax.f32 %v198, %v199
        %v214 = vmax.f32 %v213, %v200
        %215 = vmax.xlane.f32.xlu0 %v214
        %v216 = vpop.xlane.xlu0 %215
        %v217 = vadd.f32 %v189, %v190
        %v218 = vadd.f32 %v217, %v191
        %219 = vadd.xlane.f32.xlu0 %v218
        %v220 = vpop.xlane.xlu0 %219
        %v221 = vadd.f32 %v192, %v193
        %v222 = vadd.f32 %v221, %v194
        %223 = vadd.xlane.f32.xlu0 %v222
        %v224 = vpop.xlane.xlu0 %223
        %v225 = vadd.f32 %v195, %v196
        %v226 = vadd.f32 %v225, %v197
        %227 = vadd.xlane.f32.xlu0 %v226
        %v228 = vpop.xlane.xlu0 %227
        %v229 = vadd.f32 %v198, %v199
        %v230 = vadd.f32 %v229, %v200
        %231 = vadd.xlane.f32.xlu0 %v230
        %v232 = vpop.xlane.xlu0 %231
        %v233 = vsub.f32 %v189, %v204
        %v234 = vsub.f32 %v190, %v204
        %v235 = vsub.f32 %v191, %v204
        %v236 = vsub.f32 %v192, %v208
        %v237 = vsub.f32 %v193, %v208
        %v238 = vsub.f32 %v194, %v208
        %v239 = vsub.f32 %v195, %v212
        %v240 = vsub.f32 %v196, %v212
        %v241 = vsub.f32 %v197, %v212
        %v242 = vsub.f32 %v198, %v216
        %v243 = vsub.f32 %v199, %v216
        %v244 = vsub.f32 %v200, %v216
        %v245 = vmul.f32 %v233, 1.442695
        %v246 = vpow.pop %v245
        %v247 = vmul.f32 %v234, 1.442695
        %v248 = vpow.pop %v247
        %v249 = vmul.f32 %v235, 1.442695
        %v250 = vpow.pop %v249
        %v251 = vmul.f32 %v236, 1.442695
        %v252 = vpow.pop %v251
        %v253 = vmul.f32 %v237, 1.442695
        %v254 = vpow.pop %v253
        %v255 = vmul.f32 %v238, 1.442695
        %v256 = vpow.pop %v255
        %v257 = vmul.f32 %v239, 1.442695
        %v258 = vpow.pop %v257
        %v259 = vmul.f32 %v240, 1.442695
        %v260 = vpow.pop %v259
        %v261 = vmul.f32 %v241, 1.442695
        %v262 = vpow.pop %v261
        %v263 = vmul.f32 %v242, 1.442695
        %v264 = vpow.pop %v263
        %v265 = vmul.f32 %v243, 1.442695
        %v266 = vpow.pop %v265
        %v267 = vmul.f32 %v244, 1.442695
        %v268 = vpow.pop %v267
        %v269 = vadd.f32 %v246, %v248
        %v270 = vadd.f32 %v269, %v250
        %271 = vadd.xlane.f32.xlu0 %v270
        %v272 = vpop.xlane.xlu0 %271
        %v273 = vadd.f32 %v252, %v254
        %v274 = vadd.f32 %v273, %v256
        %275 = vadd.xlane.f32.xlu0 %v274
        %v276 = vpop.xlane.xlu0 %275
        %v277 = vadd.f32 %v258, %v260
        %v278 = vadd.f32 %v277, %v262
        %279 = vadd.xlane.f32.xlu0 %v278
        %v280 = vpop.xlane.xlu0 %279
        %v281 = vadd.f32 %v264, %v266
        %v282 = vadd.f32 %v281, %v268
        %283 = vadd.xlane.f32.xlu0 %v282
        %v284 = vpop.xlane.xlu0 %283
        %v285 = vlog2.pop %v272
        %v286 = vmul.f32 %v285, 0.6931472
        %v287 = vlog2.pop %v276
        %v288 = vmul.f32 %v287, 0.6931472
        %v289 = vlog2.pop %v280
        %v290 = vmul.f32 %v289, 0.6931472
        %v291 = vlog2.pop %v284
        %v292 = vmul.f32 %v291, 0.6931472
        %v293 = vadd.f32 %v204, %v286
        %v294 = vadd.f32 %v208, %v288
        %v295 = vadd.f32 %v212, %v290
        %v296 = vadd.f32 %v216, %v292
        %v297 = vmul.f32 %v293, 384.0
        %v298 = vmul.f32 %v294, 384.0
        %v299 = vmul.f32 %v295, 384.0
        %v300 = vmul.f32 %v296, 384.0
        %v301 = vsub.f32 %v220, %v297
        %v302 = vsub.f32 %v224, %v298
        %v303 = vsub.f32 %v228, %v299
        %v304 = vsub.f32 %v232, %v300
        %v305 = vld [vmem:[%s181] sm:$0xff]
        %v306 = vld [vmem:[%s181 + $0x8] sm:$0xff]
        %v307 = vld [vmem:[%s181 + $0x10] sm:$0xff]
        %v308 = vld [vmem:[%s181 + $0x18] sm:$0xff]
        %v309 = vsub.f32 %v305, %v204
        %v310 = vsub.f32 %v306, %v208
        %v311 = vsub.f32 %v307, %v212
        %v312 = vsub.f32 %v308, %v216
        %v313 = vsub.f32 %v309, %v286
        %v314 = vsub.f32 %v310, %v288
        %v315 = vsub.f32 %v311, %v290
        %v316 = vsub.f32 %v312, %v292
        %v317 = vmul.f32 %v301, 0.0002610966
        %v318 = vmul.f32 %v302, 0.0002610966
        %v319 = vmul.f32 %v303, 0.0002610966
        %v320 = vmul.f32 %v304, 0.0002610966
        %v321 = vmul.f32 %v313, 0.8997389
        %v322 = vmul.f32 %v314, 0.8997389
        %v323 = vmul.f32 %v315, 0.8997389
        %v324 = vmul.f32 %v316, 0.8997389
        %v325 = vadd.f32 %v317, %v321
        %v326 = vadd.f32 %v318, %v322
        %v327 = vadd.f32 %v319, %v323
        %v328 = vadd.f32 %v320, %v324
        %v329 = vsub.f32 0.0, %v325
        %v330 = vsub.f32 0.0, %v326
        %v331 = vsub.f32 0.0, %v327
        %v332 = vsub.f32 0.0, %v328
        %vm333 = vcmask 7168
        %334 = vst.msk [vmem:[%s187] sm:$0xff] %vm333, %v329
        %335 = vst.msk [vmem:[%s187 + $0x8] sm:$0xff] %vm333, %v330
        %336 = vst.msk [vmem:[%s187 + $0x10] sm:$0xff] %vm333, %v331
        %337 = vst.msk [vmem:[%s187 + $0x18] sm:$0xff] %vm333, %v332
        %s338 = smul.u32 4, %s16
        %p339 = scmp.lt.s32.totalorder %s338, 7
        %s340 = scalar_select %p339, %s338, 7
        %s341 = smul.addr %s340, 8
        %s342 = scalar_lea.vmem %s2, %s341
        // Predicated region
        $region33: #{tpu_custom_call.1} parent=27 // pred_check
          %p343 = pneg %p86
        $region34: #{tpu_custom_call.1} parent=27 // pred_check_branch
          %345 = sbr.rel (%p343) target = $region36
        $region35: #{tpu_custom_call.1} parent=27 // pred_region
          %s346 = smul.u32 4, %s16
        $region36: #{tpu_custom_call.1} parent=27 // pred_fallthru
          _
      $region28: #{tpu_custom_call.1} parent=5 // pred_fallthru
        _
      %p347 = scmp.le.s32.totalorder 2, %s11
      // Predicated region
      $region37: #{tpu_custom_call.1} parent=5 // pred_check
        %p348 = pneg %p347
      $region38: #{tpu_custom_call.1} parent=5 // pred_check_branch
        %350 = sbr.rel (%p348) target = $region40
      $region39: #{tpu_custom_call.1} parent=5 // pred_region
        %s351 = ssub.s32 %s11, 2
        // Predicated region
        $region41: #{tpu_custom_call.1} parent=39 // pred_check
          %p352 = pneg %p92
        $region42: #{tpu_custom_call.1} parent=39 // pred_check_branch
          %354 = sbr.rel (%p352) target = $region44
        $region43: #{tpu_custom_call.1} parent=39 // pred_region
          %s355 = smul.u32 4, %s17
          %p356 = scmp.lt.s32.totalorder %s355, 7
          %s357 = scalar_select %p356, %s355, 7
          %s358 = smul.addr %s357, 8
          %s359 = scalar_lea.vmem %s2, %s358
        $region44: #{tpu_custom_call.1} parent=39 // pred_fallthru
          _
      $region40: #{tpu_custom_call.1} parent=5 // pred_fallthru
        _
    $region6: #{tpu_custom_call.1} parent=1 // loop_footer
      %s15 = sadd.s32 1, %s11
    $region7: #{tpu_custom_call.1} parent=1 // loop_footer_branch
      %10 = sbr.rel target = $region3
    $region8: #{tpu_custom_call.1} parent=1 // loop_exit
      _
    %360 = vsyncpa [#allocation3], 1
    %s361 = scalar_lea.sflag [#allocation3], 1
    %362 = vsyncpa %s361, 1

</llo_original>
